<compile_context>
chip_gen: v7x
topology: tpu7x:2x2x1
jax: 0.10.0
libtpu: 0.0.40
codegen_flags: <defaults>
</compile_context>

<pallas_src>
import functools
import math

import jax
import jax.numpy as jnp
from jax.experimental import pallas as pl
from jax.experimental.pallas import tpu as pltpu


def _round_up(x, m):
    return (x + m - 1) // m * m


def _pick_batch_tile(batch, l_pad, e_pad, itemsize=2, vmem_budget=8 << 20):
    """Pick a batch tile TB.

    TB is a multiple of 8 that divides `batch` (keeps the (8,128) block rule on
    the (TB, C) output block), sized so 2x double-buffered input blocks stay
    well under a conservative scoped-VMEM budget (safe for v7x's 64 MiB VMEM /
    32 MiB default scoped limit).  Prefers >= 2 grid tiles so v7x can shard the
    batch axis across its two TensorCores.  Falls back to the whole batch
    (full-dim escape hatch of the block rule) for tiny batches.
    """
    row_bytes = l_pad * e_pad * itemsize
    cap = max(8, (vmem_budget // (2 * row_bytes)) // 8 * 8)
    divisors = [t for t in range(8, min(batch, cap) + 1, 8) if batch % t == 0]
    if not divisors:
        return batch
    multi = [t for t in divisors if batch // t >= 2]
    return (multi or divisors)[-1]


# ----------------------------------------------------------------------------
# Fused Pallas kernel: all conv branches + ReLU + max-pool + concat + FC
# ----------------------------------------------------------------------------
def _fused_cnn_kernel(x_ref, *refs, ksizes, l_outs, l_eff):
    """x_ref: (TB, L_pad, E_pad) bf16
    refs:  (w_0, b_0, ..., w_{n-1}, b_{n-1}, fc_w, fc_b, out)
           w_i: (k_i*E_pad, F_i) bf16   b_i: (1, F_i) f32
           fc_w: (F_total, C) bf16      fc_b: (1, C) f32     out: (TB, C) f32
    """
    n = len(ksizes)
    conv_w_refs = refs[0:2 * n:2]
    conv_b_refs = refs[1:2 * n:2]
    fcw_ref, fcb_ref, o_ref = refs[2 * n], refs[2 * n + 1], refs[2 * n + 2]

    x = x_ref[...]                                   # (TB, L_pad, E_pad) bf16
    tb = x.shape[0]
    e_pad = x.shape[-1]

    pools = []
    for i in range(n):
        k, l_out = ksizes[i], l_outs[i]
        # im2col: one lane-dense (TB*L_eff, k*E_pad) slab -> single MXU matmul.
        slabs = [x[:, j:j + l_eff, :] for j in range(k)]
        patches = slabs[0] if k == 1 else jnp.concatenate(slabs, axis=-1)
        patches = patches.reshape(tb * l_eff, k * e_pad)         # aligned merge

        acc = jnp.dot(patches, conv_w_refs[i][...],
                      preferred_element_type=jnp.float32)        # (TB*L_eff, F)
        acc = jnp.maximum(acc + conv_b_refs[i][...], 0.0)        # bias + ReLU
        acc = acc.reshape(tb, l_eff, acc.shape[-1])              # aligned split

        if l_out < l_eff:
            # Positions >= l_out fall in the zero padding -> exclude from pool.
            l_idx = jax.lax.broadcasted_iota(jnp.int32, acc.shape, 1)
            acc = jnp.where(l_idx < l_out, acc, -jnp.inf)
        pools.append(jnp.max(acc, axis=1))                       # (TB, F_i)

    x_fc = pools[0] if n == 1 else jnp.concatenate(pools, axis=1)  # (TB, Ftot)
    logits = jnp.dot(x_fc.astype(jnp.bfloat16), fcw_ref[...],
                     preferred_element_type=jnp.float32) + fcb_ref[...]
    o_ref[...] = logits.astype(o_ref.dtype)


def fused_cnn_forward(x_pad, conv_ws, conv_bs, fc_w, fc_b, ksizes, l_outs,
                      l_eff):
    """x_pad: (B, L_pad, E_pad) bf16 -> logits (B, C) f32 via one pallas_call."""
    B, l_pad, e_pad = x_pad.shape
    f_total, num_classes = fc_w.shape

    tb = _pick_batch_tile(B, l_pad, e_pad, itemsize=x_pad.dtype.itemsize)
    grid = (B // tb,)

    in_specs = [pl.BlockSpec((tb, l_pad, e_pad), lambda i: (i, 0, 0))]
    operands = [x_pad]
    for w, b in zip(conv_ws, conv_bs):
        in_specs.append(pl.BlockSpec(w.shape, lambda i: (0, 0)))
        in_specs.append(pl.BlockSpec(b.shape, lambda i: (0, 0)))
        operands += [w, b]
    in_specs.append(pl.BlockSpec(fc_w.shape, lambda i: (0, 0)))
    in_specs.append(pl.BlockSpec(fc_b.shape, lambda i: (0, 0)))
    operands += [fc_w, fc_b]

    kernel = functools.partial(_fused_cnn_kernel, ksizes=tuple(ksizes),
                               l_outs=tuple(l_outs), l_eff=int(l_eff))

    flops = sum(2 * B * l_eff * int(w.shape[0]) * int(w.shape[1])
                for w in conv_ws) + 2 * B * f_total * num_classes
    bytes_accessed = sum(int(a.size) * a.dtype.itemsize for a in operands)
    bytes_accessed += B * num_classes * 4

    return pl.pallas_call(
        kernel,
        out_shape=jax.ShapeDtypeStruct((B, num_classes), jnp.float32),
        grid=grid,
        in_specs=in_specs,
        out_specs=pl.BlockSpec((tb, num_classes), lambda i: (i, 0)),
        compiler_params=pltpu.CompilerParams(
            dimension_semantics=("parallel",)),
        cost_estimate=pl.CostEstimate(flops=int(flops), transcendentals=0,
                                      bytes_accessed=int(bytes_accessed)),
    )(*operands)


# ----------------------------------------------------------------------------
# Parameters (deterministic init) + forward glue
# ----------------------------------------------------------------------------
def init_params(key, cuis_size, embed_dim, filter_sizes, num_filters,
                num_classes):
    e_pad = _round_up(embed_dim, 128)          # lane-dense embedding width
    keys = jax.random.split(key, 2 * len(filter_sizes) + 3)

    # Embedding table, padding_idx=0 -> row 0 zeros; extra columns stay zero.
    emb = jnp.zeros((cuis_size, e_pad), jnp.float32)
    emb = emb.at[:, :embed_dim].set(
        jax.random.normal(keys[0], (cuis_size, embed_dim), jnp.float32))
    emb = emb.at[0].set(0.0)

    convs = []
    for i, (k, f) in enumerate(zip(filter_sizes, num_filters)):
        bound = 1.0 / math.sqrt(embed_dim * k)
        w = jax.random.uniform(keys[1 + 2 * i], (k, embed_dim, f),
                               jnp.float32, -bound, bound)
        # Store as the im2col weight slab (k*E_pad, F); padded rows are zero.
        w_pad = jnp.zeros((k, e_pad, f), jnp.float32)
        w_pad = w_pad.at[:, :embed_dim, :].set(w)
        w_slab = w_pad.reshape(k * e_pad, f).astype(jnp.bfloat16)
        b = jax.random.uniform(keys[2 + 2 * i], (1, f), jnp.float32,
                               -bound, bound)
        convs.append((w_slab, b))

    f_total = int(sum(num_filters))
    fbound = 1.0 / math.sqrt(f_total)
    fc_w = jax.random.uniform(keys[-2], (f_total, num_classes),
                              jnp.float32, -fbound, fbound).astype(jnp.bfloat16)
    fc_b = jax.random.uniform(keys[-1], (1, num_classes), jnp.float32,
                              -fbound, fbound)

    return {"embedding": emb, "embed_dim": int(embed_dim),
            "filter_sizes": tuple(int(k) for k in filter_sizes),
            "convs": convs, "fc_w": fc_w, "fc_b": fc_b}


def cnn_feedforward_forward(params, input_ids, mask=False):
    filter_sizes = params["filter_sizes"]

    # nn.Embedding(padding_idx=0, max_norm=5.0): gather + clamp row L2 norms.
    # TODO(synk): for large B*L, fuse this gather into the kernel via
    # PrefetchScalarGridSpec row gather instead of materializing x_embed.
    x = jnp.take(params["embedding"], input_ids.astype(jnp.int32), axis=0)
    norms = jnp.linalg.norm(x, axis=-1, keepdims=True)
    x = x * jnp.minimum(1.0, 5.0 / jnp.maximum(norms, 1e-12))
    if mask:
        x = x * (input_ids != 0).astype(x.dtype)[..., None]

    B, L, _ = x.shape
    k_max = max(filter_sizes)
    assert L >= k_max, f"sequence length {L} shorter than largest filter {k_max}"
    l_eff = _round_up(L, 8)                 # sublane-aligned conv positions
    l_pad = l_eff + k_max - 1               # room for every shifted tap slab
    l_outs = tuple(L - k + 1 for k in filter_sizes)

    x = jnp.pad(x, ((0, 0), (0, l_pad - L), (0, 0))).astype(jnp.bfloat16)

    conv_ws = [w for (w, _) in params["convs"]]
    conv_bs = [b for (_, b) in params["convs"]]
    # nn.Dropout: inference-mode identity.
    # TODO(synk): train-mode stochastic dropout not implemented (eval identity).
    return fused_cnn_forward(x, conv_ws, conv_bs, params["fc_w"],
                             params["fc_b"], filter_sizes, l_outs, l_eff)


# ----------------------------------------------------------------------------
if __name__ == "__main__":
    B, L = 16, 8
    cuis_size = 50
    embed_dim = 32            # padded to 128 lanes inside the model
    filter_sizes = [1, 3]     # kernel_size=3 matches the module's local default
    num_filters = [128, 128]
    num_classes = 2

    key = jax.random.PRNGKey(0)
    pkey, dkey = jax.random.split(key)

    params = init_params(pkey, cuis_size, embed_dim, filter_sizes, num_filters,
                         num_classes)
    input_ids = jax.random.randint(dkey, (B, L), 0, cuis_size, dtype=jnp.int32)

    logits = cnn_feedforward_forward(params, input_ids, mask=False)
    logits = jax.block_until_ready(logits)

    assert logits.shape == (B, num_classes)
    assert bool(jnp.all(jnp.isfinite(logits)))
    print("KERNEL_OK")
</pallas_src>

<mosaic_0001>
module attributes {stable_mosaic.version = 11 : i64} {
  func.func @_fused_cnn_kernel(%arg0: i32, %arg1: memref<8x10x128xbf16, #tpu.memory_space<vmem>>, %arg2: memref<128x128xbf16, #tpu.memory_space<vmem>>, %arg3: memref<1x128xf32, #tpu.memory_space<vmem>>, %arg4: memref<384x128xbf16, #tpu.memory_space<vmem>>, %arg5: memref<1x128xf32, #tpu.memory_space<vmem>>, %arg6: memref<256x2xbf16, #tpu.memory_space<vmem>>, %arg7: memref<1x2xf32, #tpu.memory_space<vmem>>, %arg8: memref<8x2xf32, #tpu.memory_space<vmem>>) attributes {dimension_semantics = [#tpu.dimension_semantics<parallel>], iteration_bounds = array<i64: 2>, scalar_prefetch = 0 : i64, scratch_operands = 0 : i64, tpu.core_type = #tpu.core_type<tc>, window_params = [{transform_indices = @transform_0, window_bounds = array<i64: 8, 10, 128>}, {pipeline_mode = #tpu.pipeline_mode<synchronous>, transform_indices = @transform_1, window_bounds = array<i64: 128, 128>}, {pipeline_mode = #tpu.pipeline_mode<synchronous>, transform_indices = @transform_2, window_bounds = array<i64: 1, 128>}, {pipeline_mode = #tpu.pipeline_mode<synchronous>, transform_indices = @transform_3, window_bounds = array<i64: 384, 128>}, {pipeline_mode = #tpu.pipeline_mode<synchronous>, transform_indices = @transform_4, window_bounds = array<i64: 1, 128>}, {pipeline_mode = #tpu.pipeline_mode<synchronous>, transform_indices = @transform_5, window_bounds = array<i64: 256, 2>}, {pipeline_mode = #tpu.pipeline_mode<synchronous>, transform_indices = @transform_6, window_bounds = array<i64: 1, 2>}, {transform_indices = @transform_7, window_bounds = array<i64: 8, 2>}]} {
    %c0 = arith.constant 0 : index
    %c0_0 = arith.constant 0 : index
    %c0_1 = arith.constant 0 : index
    %0 = vector.load %arg1[%c0, %c0_0, %c0_1] : memref<8x10x128xbf16, #tpu.memory_space<vmem>>, vector<8x10x128xbf16>
    %1 = vector.extract_strided_slice %0 {offsets = [0, 0, 0], sizes = [8, 8, 128], strides = [1, 1, 1]} : vector<8x10x128xbf16> to vector<8x8x128xbf16>
    %2 = vector.shape_cast %1 : vector<8x8x128xbf16> to vector<64x128xbf16>
    %c0_2 = arith.constant 0 : index
    %c0_3 = arith.constant 0 : index
    %3 = vector.load %arg2[%c0_2, %c0_3] : memref<128x128xbf16, #tpu.memory_space<vmem>>, vector<128x128xbf16>
    %cst = arith.constant dense<0.000000e+00> : vector<64x128xf32>
    %4 = tpu.matmul %2, %3, %cst {dimension_numbers = #tpu.dot_dimension_numbers<[1], [0], [0], [1], [0, 0, 1, 1], [], []>} : vector<64x128xbf16>, vector<128x128xbf16>, vector<64x128xf32> -> vector<64x128xf32>
    %c0_4 = arith.constant 0 : index
    %c0_5 = arith.constant 0 : index
    %5 = vector.load %arg3[%c0_4, %c0_5] : memref<1x128xf32, #tpu.memory_space<vmem>>, vector<1x128xf32>
    %6 = vector.broadcast %5 : vector<1x128xf32> to vector<64x128xf32>
    %7 = arith.addf %4, %6 : vector<64x128xf32>
    %cst_6 = arith.constant 0.000000e+00 : f32
    %8 = vector.broadcast %cst_6 : f32 to vector<64x128xf32>
    %9 = arith.maximumf %7, %8 : vector<64x128xf32>
    %10 = vector.shape_cast %9 : vector<64x128xf32> to vector<8x8x128xf32>
    %cst_7 = arith.constant dense<0xFF800000> : vector<8x128xf32>
    %11 = vector.multi_reduction <maximumf>, %10, %cst_7 [1] : vector<8x8x128xf32> to vector<8x128xf32>
    %12 = vector.extract_strided_slice %0 {offsets = [0, 0, 0], sizes = [8, 8, 128], strides = [1, 1, 1]} : vector<8x10x128xbf16> to vector<8x8x128xbf16>
    %13 = vector.extract_strided_slice %0 {offsets = [0, 1, 0], sizes = [8, 8, 128], strides = [1, 1, 1]} : vector<8x10x128xbf16> to vector<8x8x128xbf16>
    %14 = vector.extract_strided_slice %0 {offsets = [0, 2, 0], sizes = [8, 8, 128], strides = [1, 1, 1]} : vector<8x10x128xbf16> to vector<8x8x128xbf16>
    %15 = tpu.concatenate %12, %13, %14 in 2 : vector<8x8x128xbf16>, vector<8x8x128xbf16>, vector<8x8x128xbf16> -> vector<8x8x384xbf16>
    %16 = vector.shape_cast %15 : vector<8x8x384xbf16> to vector<64x384xbf16>
    %c0_8 = arith.constant 0 : index
    %c0_9 = arith.constant 0 : index
    %17 = vector.load %arg4[%c0_8, %c0_9] : memref<384x128xbf16, #tpu.memory_space<vmem>>, vector<384x128xbf16>
    %cst_10 = arith.constant dense<0.000000e+00> : vector<64x128xf32>
    %18 = tpu.matmul %16, %17, %cst_10 {dimension_numbers = #tpu.dot_dimension_numbers<[1], [0], [0], [1], [0, 0, 1, 1], [], []>} : vector<64x384xbf16>, vector<384x128xbf16>, vector<64x128xf32> -> vector<64x128xf32>
    %c0_11 = arith.constant 0 : index
    %c0_12 = arith.constant 0 : index
    %19 = vector.load %arg5[%c0_11, %c0_12] : memref<1x128xf32, #tpu.memory_space<vmem>>, vector<1x128xf32>
    %20 = vector.broadcast %19 : vector<1x128xf32> to vector<64x128xf32>
    %21 = arith.addf %18, %20 : vector<64x128xf32>
    %cst_13 = arith.constant 0.000000e+00 : f32
    %22 = vector.broadcast %cst_13 : f32 to vector<64x128xf32>
    %23 = arith.maximumf %21, %22 : vector<64x128xf32>
    %24 = vector.shape_cast %23 : vector<64x128xf32> to vector<8x8x128xf32>
    %25 = tpu.iota {dimensions = array<i32: 1>} : vector<8x8x128xi32>
    %c6_i32 = arith.constant 6 : i32
    %26 = vector.broadcast %c6_i32 : i32 to vector<8x8x128xi32>
    %27 = arith.cmpi slt, %25, %26 : vector<8x8x128xi32>
    %cst_14 = arith.constant 0xFF800000 : f32
    %28 = vector.broadcast %cst_14 : f32 to vector<8x8x128xf32>
    %29 = arith.select %27, %24, %28 : vector<8x8x128xi1>, vector<8x8x128xf32>
    %cst_15 = arith.constant dense<0xFF800000> : vector<8x128xf32>
    %30 = vector.multi_reduction <maximumf>, %29, %cst_15 [1] : vector<8x8x128xf32> to vector<8x128xf32>
    %31 = tpu.concatenate %11, %30 in 1 : vector<8x128xf32>, vector<8x128xf32> -> vector<8x256xf32>
    %32 = arith.truncf %31 : vector<8x256xf32> to vector<8x256xbf16>
    %c0_16 = arith.constant 0 : index
    %c0_17 = arith.constant 0 : index
    %33 = vector.load %arg6[%c0_16, %c0_17] : memref<256x2xbf16, #tpu.memory_space<vmem>>, vector<256x2xbf16>
    %cst_18 = arith.constant dense<0.000000e+00> : vector<8x2xf32>
    %34 = tpu.matmul %32, %33, %cst_18 {dimension_numbers = #tpu.dot_dimension_numbers<[1], [0], [0], [1], [0, 0, 1, 1], [], []>} : vector<8x256xbf16>, vector<256x2xbf16>, vector<8x2xf32> -> vector<8x2xf32>
    %c0_19 = arith.constant 0 : index
    %c0_20 = arith.constant 0 : index
    %35 = vector.load %arg7[%c0_19, %c0_20] : memref<1x2xf32, #tpu.memory_space<vmem>>, vector<1x2xf32>
    %36 = vector.broadcast %35 : vector<1x2xf32> to vector<8x2xf32>
    %37 = arith.addf %34, %36 : vector<8x2xf32>
    %c0_21 = arith.constant 0 : index
    %c0_22 = arith.constant 0 : index
    %38 = vector.load %arg8[%c0_21, %c0_22] : memref<8x2xf32, #tpu.memory_space<vmem>>, vector<8x2xf32>
    tpu.vector_store %arg8[%c0_21, %c0_22], %37 {strides = array<i32>} : memref<8x2xf32, #tpu.memory_space<vmem>>, vector<8x2xf32>,
    return
  }
  func.func @transform_0(%arg0: i32) -> (i32, i32, i32) {
    %c0_i32 = arith.constant 0 : i32
    %c0_i32_0 = arith.constant 0 : i32
    %c0_i32_1 = arith.constant 0 : i32
    return %arg0, %c0_i32, %c0_i32_0 : i32, i32, i32
  }
  func.func @transform_1(%arg0: i32) -> (i32, i32) {
    %c0_i32 = arith.constant 0 : i32
    %c0_i32_0 = arith.constant 0 : i32
    %c0_i32_1 = arith.constant 0 : i32
    return %c0_i32, %c0_i32_0 : i32, i32
  }
  func.func @transform_2(%arg0: i32) -> (i32, i32) {
    %c0_i32 = arith.constant 0 : i32
    %c0_i32_0 = arith.constant 0 : i32
    %c0_i32_1 = arith.constant 0 : i32
    return %c0_i32, %c0_i32_0 : i32, i32
  }
  func.func @transform_3(%arg0: i32) -> (i32, i32) {
    %c0_i32 = arith.constant 0 : i32
    %c0_i32_0 = arith.constant 0 : i32
    %c0_i32_1 = arith.constant 0 : i32
    return %c0_i32, %c0_i32_0 : i32, i32
  }
  func.func @transform_4(%arg0: i32) -> (i32, i32) {
    %c0_i32 = arith.constant 0 : i32
    %c0_i32_0 = arith.constant 0 : i32
    %c0_i32_1 = arith.constant 0 : i32
    return %c0_i32, %c0_i32_0 : i32, i32
  }
  func.func @transform_5(%arg0: i32) -> (i32, i32) {
    %c0_i32 = arith.constant 0 : i32
    %c0_i32_0 = arith.constant 0 : i32
    %c0_i32_1 = arith.constant 0 : i32
    return %c0_i32, %c0_i32_0 : i32, i32
  }
  func.func @transform_6(%arg0: i32) -> (i32, i32) {
    %c0_i32 = arith.constant 0 : i32
    %c0_i32_0 = arith.constant 0 : i32
    %c0_i32_1 = arith.constant 0 : i32
    return %c0_i32, %c0_i32_0 : i32, i32
  }
  func.func @transform_7(%arg0: i32) -> (i32, i32) {
    %c0_i32 = arith.constant 0 : i32
    %c0_i32_0 = arith.constant 0 : i32
    return %arg0, %c0_i32 : i32, i32
  }
}

</mosaic_0001>

<llo_original>
// kernel: tpu_custom_call.1
$region0: #{tpu_custom_call.1}
  #allocation0 [shape = 'u32[]', space=smem, size = 0x4, offset = 0x4, fixed_abs, tag = 'smem constant byte address 0x4 - core index']
  #allocation1 [shape = 'u32[144,128]{1,0:T(1,128)}', space=vmem, size = 0x12000, scoped, tag = 'internal scratch']
  %s0 = inlined_call_operand.vmem [shape: bf16[16,10,128], index: 0, kind: input, shape index: {}]
  %s1 = inlined_call_operand.vmem [shape: bf16[128,128], index: 1, kind: input, shape index: {}]
  %s2 = inlined_call_operand.vmem [shape: f32[1,128], index: 2, kind: input, shape index: {}]
  %s3 = inlined_call_operand.vmem [shape: bf16[384,128], index: 3, kind: input, shape index: {}]
  %s4 = inlined_call_operand.vmem [shape: f32[1,128], index: 4, kind: input, shape index: {}]
  %s5 = inlined_call_operand.vmem [shape: bf16[256,2], index: 5, kind: input, shape index: {}]
  %s6 = inlined_call_operand.vmem [shape: f32[1,2], index: 6, kind: input, shape index: {}]
  %s7 = inlined_call_operand.vmem [shape: f32[16,2], index: 7, kind: output, shape index: {}]
  %s8 = sld [smem:[#allocation0]]
  $region61: #{tpu_custom_call.1} parent=0
    _
  %s10 = ssub.s32 1, %s8
  %s11 = scalar_select 0, %s10, %s8
  loop: start=0, step=1, limit=4
  $region2: #{tpu_custom_call.1} parent=0 // loop_pre_header
    _
  $region3: #{tpu_custom_call.1} parent=0 // loop_header
    %s13 = sphi 0, %s17
    %p14 = scmp.ge.s32.totalorder %s13, 4
    %s23 = sphi 0, %s25
    %s26 = sphi 0, %s23
    %s27 = sphi 0, %s26
    %s43 = sphi 0, %s27
    %s47 = sphi 0, %s47
    %s49 = sphi 0, %s47
    %s50 = sphi 0, %s49
    %s64 = sphi 0, %s50
    %s68 = sphi 0, %s68
    %s70 = sphi 0, %s68
    %s71 = sphi 0, %s70
    %s85 = sphi 0, %s71
    %s89 = sphi 0, %s89
    %s91 = sphi 0, %s89
    %s92 = sphi 0, %s91
    %s106 = sphi 0, %s92
    %s110 = sphi 0, %s110
    %s112 = sphi 0, %s110
    %s113 = sphi 0, %s112
    %s127 = sphi 0, %s113
    %s131 = sphi 0, %s131
    %s133 = sphi 0, %s131
    %s134 = sphi 0, %s133
    %s148 = sphi 0, %s134
    %s152 = sphi 0, %s152
    %s154 = sphi 0, %s152
    %s155 = sphi 0, %s154
    %s169 = sphi 0, %s155
    %s175 = sphi 0, %s177
    %s178 = sphi 0, %s175
    %s179 = sphi 0, %s178
    %s195 = sphi 0, %s179
  $region4: #{tpu_custom_call.1} parent=0 // loop_header_branch
    %16 = sbr.rel (%p14) target = $region8
  $region5: #{tpu_custom_call.1} parent=0 // loop_body
    %s18 = ssub.s32 %s13, 1
    %s19 = ssub.s32 %s13, 2
    %s20 = sadd.s32 %s13, 1
    %s21 = ssub.s32 %s13, %s20
    %p22 = scmp.eq.s32.totalorder %s21, 0
    %s24 = sadd.s32 %s23, 1
    %s25 = scalar_select %p22, %s23, %s24
    %p28 = pneg %p22
    %p29 = scmp.eq.s32.totalorder %s13, 1
    %p30 = por %p28, %p29
    %p31 = scmp.ne.s32.totalorder %s23, %s26
    %p32 = scmp.eq.s32.totalorder %s13, 0
    %p33 = por %p31, %p32
    %p34 = scmp.ne.s32.totalorder %s23, %s26
    %p35 = scmp.eq.s32.totalorder %s18, 1
    %p36 = por %p34, %p35
    %p37 = scmp.ne.s32.totalorder %s26, %s27
    %p38 = scmp.eq.s32.totalorder %s18, 0
    %p39 = por %p37, %p38
    %p40 = scmp.ne.s32.totalorder %s26, %s27
    %p41 = scmp.eq.s32.totalorder %s19, 1
    %p42 = por %p40, %p41
    %p44 = scmp.ne.s32.totalorder %s27, %s43
    %p45 = scmp.eq.s32.totalorder %s19, 0
    %p46 = por %p44, %p45
    %s48 = sadd.s32 %s47, 1
    %p51 = scmp.eq.s32.totalorder %s13, 1
    %p52 = scmp.ne.s32.totalorder %s47, %s49
    %p53 = scmp.eq.s32.totalorder %s13, 0
    %p54 = por %p52, %p53
    %p55 = scmp.ne.s32.totalorder %s47, %s49
    %p56 = scmp.eq.s32.totalorder %s18, 1
    %p57 = por %p55, %p56
    %p58 = scmp.ne.s32.totalorder %s49, %s50
    %p59 = scmp.eq.s32.totalorder %s18, 0
    %p60 = por %p58, %p59
    %p61 = scmp.ne.s32.totalorder %s49, %s50
    %p62 = scmp.eq.s32.totalorder %s19, 1
    %p63 = por %p61, %p62
    %p65 = scmp.ne.s32.totalorder %s50, %s64
    %p66 = scmp.eq.s32.totalorder %s19, 0
    %p67 = por %p65, %p66
    %s69 = sadd.s32 %s68, 1
    %p72 = scmp.eq.s32.totalorder %s13, 1
    %p73 = scmp.ne.s32.totalorder %s68, %s70
    %p74 = scmp.eq.s32.totalorder %s13, 0
    %p75 = por %p73, %p74
    %p76 = scmp.ne.s32.totalorder %s68, %s70
    %p77 = scmp.eq.s32.totalorder %s18, 1
    %p78 = por %p76, %p77
    %p79 = scmp.ne.s32.totalorder %s70, %s71
    %p80 = scmp.eq.s32.totalorder %s18, 0
    %p81 = por %p79, %p80
    %p82 = scmp.ne.s32.totalorder %s70, %s71
    %p83 = scmp.eq.s32.totalorder %s19, 1
    %p84 = por %p82, %p83
    %p86 = scmp.ne.s32.totalorder %s71, %s85
    %p87 = scmp.eq.s32.totalorder %s19, 0
    %p88 = por %p86, %p87
    %s90 = sadd.s32 %s89, 1
    %p93 = scmp.eq.s32.totalorder %s13, 1
    %p94 = scmp.ne.s32.totalorder %s89, %s91
    %p95 = scmp.eq.s32.totalorder %s13, 0
    %p96 = por %p94, %p95
    %p97 = scmp.ne.s32.totalorder %s89, %s91
    %p98 = scmp.eq.s32.totalorder %s18, 1
    %p99 = por %p97, %p98
    %p100 = scmp.ne.s32.totalorder %s91, %s92
    %p101 = scmp.eq.s32.totalorder %s18, 0
    %p102 = por %p100, %p101
    %p103 = scmp.ne.s32.totalorder %s91, %s92
    %p104 = scmp.eq.s32.totalorder %s19, 1
    %p105 = por %p103, %p104
    %p107 = scmp.ne.s32.totalorder %s92, %s106
    %p108 = scmp.eq.s32.totalorder %s19, 0
    %p109 = por %p107, %p108
    %s111 = sadd.s32 %s110, 1
    %p114 = scmp.eq.s32.totalorder %s13, 1
    %p115 = scmp.ne.s32.totalorder %s110, %s112
    %p116 = scmp.eq.s32.totalorder %s13, 0
    %p117 = por %p115, %p116
    %p118 = scmp.ne.s32.totalorder %s110, %s112
    %p119 = scmp.eq.s32.totalorder %s18, 1
    %p120 = por %p118, %p119
    %p121 = scmp.ne.s32.totalorder %s112, %s113
    %p122 = scmp.eq.s32.totalorder %s18, 0
    %p123 = por %p121, %p122
    %p124 = scmp.ne.s32.totalorder %s112, %s113
    %p125 = scmp.eq.s32.totalorder %s19, 1
    %p126 = por %p124, %p125
    %p128 = scmp.ne.s32.totalorder %s113, %s127
    %p129 = scmp.eq.s32.totalorder %s19, 0
    %p130 = por %p128, %p129
    %s132 = sadd.s32 %s131, 1
    %p135 = scmp.eq.s32.totalorder %s13, 1
    %p136 = scmp.ne.s32.totalorder %s131, %s133
    %p137 = scmp.eq.s32.totalorder %s13, 0
    %p138 = por %p136, %p137
    %p139 = scmp.ne.s32.totalorder %s131, %s133
    %p140 = scmp.eq.s32.totalorder %s18, 1
    %p141 = por %p139, %p140
    %p142 = scmp.ne.s32.totalorder %s133, %s134
    %p143 = scmp.eq.s32.totalorder %s18, 0
    %p144 = por %p142, %p143
    %p145 = scmp.ne.s32.totalorder %s133, %s134
    %p146 = scmp.eq.s32.totalorder %s19, 1
    %p147 = por %p145, %p146
    %p149 = scmp.ne.s32.totalorder %s134, %s148
    %p150 = scmp.eq.s32.totalorder %s19, 0
    %p151 = por %p149, %p150
    %s153 = sadd.s32 %s152, 1
    %p156 = scmp.eq.s32.totalorder %s13, 1
    %p157 = scmp.ne.s32.totalorder %s152, %s154
    %p158 = scmp.eq.s32.totalorder %s13, 0
    %p159 = por %p157, %p158
    %p160 = scmp.ne.s32.totalorder %s152, %s154
    %p161 = scmp.eq.s32.totalorder %s18, 1
    %p162 = por %p160, %p161
    %p163 = scmp.ne.s32.totalorder %s154, %s155
    %p164 = scmp.eq.s32.totalorder %s18, 0
    %p165 = por %p163, %p164
    %p166 = scmp.ne.s32.totalorder %s154, %s155
    %p167 = scmp.eq.s32.totalorder %s19, 1
    %p168 = por %p166, %p167
    %p170 = scmp.ne.s32.totalorder %s155, %s169
    %p171 = scmp.eq.s32.totalorder %s19, 0
    %p172 = por %p170, %p171
    %s173 = ssub.s32 %s13, %s20
    %p174 = scmp.eq.s32.totalorder %s173, 0
    %s176 = sadd.s32 %s175, 1
    %s177 = scalar_select %p174, %s175, %s176
    %p180 = pneg %p174
    %p181 = scmp.eq.s32.totalorder %s13, 1
    %p182 = por %p180, %p181
    %p183 = scmp.ne.s32.totalorder %s175, %s178
    %p184 = scmp.eq.s32.totalorder %s13, 0
    %p185 = por %p183, %p184
    %p186 = scmp.ne.s32.totalorder %s175, %s178
    %p187 = scmp.eq.s32.totalorder %s18, 1
    %p188 = por %p186, %p187
    %p189 = scmp.ne.s32.totalorder %s178, %s179
    %p190 = scmp.eq.s32.totalorder %s18, 0
    %p191 = por %p189, %p190
    %p192 = scmp.ne.s32.totalorder %s178, %s179
    %p193 = scmp.eq.s32.totalorder %s19, 1
    %p194 = por %p192, %p193
    %p196 = scmp.ne.s32.totalorder %s179, %s195
    %p197 = scmp.eq.s32.totalorder %s19, 0
    %p198 = por %p196, %p197
    %p199 = scmp.le.s32.totalorder 1, %s13
    %p200 = scmp.lt.s32.totalorder %s13, 3
    %p201 = pnand %p199, %p200
    %p202 = pneg %p201
    // Predicated region
    $region9: #{tpu_custom_call.1} parent=5 // pred_check
      _
    $region10: #{tpu_custom_call.1} parent=5 // pred_check_branch
      %204 = sbr.rel (%p201) target = $region12
    $region11: #{tpu_custom_call.1} parent=5 // pred_region
      %s205 = ssub.s32 %s13, 1
      // Predicated region
      $region13: #{tpu_custom_call.1} parent=11 // pred_check
        %p206 = pneg %p60
      $region14: #{tpu_custom_call.1} parent=11 // pred_check_branch
        %208 = sbr.rel (%p206) target = $region16
      $region15: #{tpu_custom_call.1} parent=11 // pred_region
        _
      $region16: #{tpu_custom_call.1} parent=11 // pred_fallthru
        _
      // Predicated region
      $region17: #{tpu_custom_call.1} parent=11 // pred_check
        %p209 = pneg %p81
      $region18: #{tpu_custom_call.1} parent=11 // pred_check_branch
        %211 = sbr.rel (%p209) target = $region20
      $region19: #{tpu_custom_call.1} parent=11 // pred_region
        _
      $region20: #{tpu_custom_call.1} parent=11 // pred_fallthru
        _
      // Predicated region
      $region21: #{tpu_custom_call.1} parent=11 // pred_check
        %p212 = pneg %p102
      $region22: #{tpu_custom_call.1} parent=11 // pred_check_branch
        %214 = sbr.rel (%p212) target = $region24
      $region23: #{tpu_custom_call.1} parent=11 // pred_region
        _
      $region24: #{tpu_custom_call.1} parent=11 // pred_fallthru
        _
      // Predicated region
      $region25: #{tpu_custom_call.1} parent=11 // pred_check
        %p215 = pneg %p123
      $region26: #{tpu_custom_call.1} parent=11 // pred_check_branch
        %217 = sbr.rel (%p215) target = $region28
      $region27: #{tpu_custom_call.1} parent=11 // pred_region
        _
      $region28: #{tpu_custom_call.1} parent=11 // pred_fallthru
        _
      // Predicated region
      $region29: #{tpu_custom_call.1} parent=11 // pred_check
        %p218 = pneg %p144
      $region30: #{tpu_custom_call.1} parent=11 // pred_check_branch
        %220 = sbr.rel (%p218) target = $region32
      $region31: #{tpu_custom_call.1} parent=11 // pred_region
        _
      $region32: #{tpu_custom_call.1} parent=11 // pred_fallthru
        _
      // Predicated region
      $region33: #{tpu_custom_call.1} parent=11 // pred_check
        %p221 = pneg %p165
      $region34: #{tpu_custom_call.1} parent=11 // pred_check_branch
        %223 = sbr.rel (%p221) target = $region36
      $region35: #{tpu_custom_call.1} parent=11 // pred_region
        _
      $region36: #{tpu_custom_call.1} parent=11 // pred_fallthru
        _
    $region12: #{tpu_custom_call.1} parent=5 // pred_fallthru
      _
    %p224 = scmp.lt.s32.totalorder %s13, 2
    // Predicated region
    $region37: #{tpu_custom_call.1} parent=5 // pred_check
      %p225 = pneg %p224
    $region38: #{tpu_custom_call.1} parent=5 // pred_check_branch
      %227 = sbr.rel (%p225) target = $region40
    $region39: #{tpu_custom_call.1} parent=5 // pred_region
      // Predicated region
      $region41: #{tpu_custom_call.1} parent=39 // pred_check
        %p228 = pneg %p33
      $region42: #{tpu_custom_call.1} parent=39 // pred_check_branch
        %230 = sbr.rel (%p228) target = $region44
      $region43: #{tpu_custom_call.1} parent=39 // pred_region
        %s231 = smul.u32 8, %s13
        %p232 = scmp.lt.s32.totalorder %s231, 15
        %s233 = scalar_select %p232, %s231, 15
        %s234 = smul.addr %s233, 2
        %s235 = smul.addr %s234, 4
        %s236 = scalar_lea.vmem %s0, %s235
        %s237 = smul.u32 8, %s13
      $region44: #{tpu_custom_call.1} parent=39 // pred_fallthru
        _
    $region40: #{tpu_custom_call.1} parent=5 // pred_fallthru
      _
    %p238 = scmp.le.s32.totalorder 1, %s13
    %p239 = scmp.lt.s32.totalorder %s13, 3
    %p240 = pnand %p238, %p239
    %p241 = pneg %p240
    // Predicated region
    $region45: #{tpu_custom_call.1} parent=5 // pred_check
      _
    $region46: #{tpu_custom_call.1} parent=5 // pred_check_branch
      %243 = sbr.rel (%p240) target = $region48
    $region47: #{tpu_custom_call.1} parent=5 // pred_region
      %s244 = ssub.s32 %s13, 1
      %s245 = smul.u32 8, %s18
      %p246 = scmp.lt.s32.totalorder %s245, 15
      %s247 = scalar_select %p246, %s245, 15
      %s248 = smul.addr %s247, 2
      %s249 = smul.addr %s248, 4
      %s250 = scalar_lea.vmem %s0, %s249
      %p251 = pneg %p39
      %p252 = pneg %p36
      %p253 = pneg %p60
      %p254 = pneg %p57
      %p255 = pneg %p81
      %p256 = pneg %p78
      %p257 = pneg %p102
      %p258 = pneg %p99
      %p259 = pneg %p123
      %p260 = pneg %p120
      %p261 = pneg %p144
      %p262 = pneg %p141
      %p263 = pneg %p165
      %p264 = pneg %p162
      %p265 = pneg %p191
      %p266 = pneg %p188
      %p267 = scmp.lt.s32.totalorder %s18, 1
      %s268 = scalar_select %p267, %s18, 1
      %s269 = smul.addr %s268, 8
      %s270 = scalar_lea.vmem %s7, %s269
      %s271 = smul.u32 8, %s18
      %p272 = scmp.lt.s32.totalorder %s271, 15
      %s273 = scalar_select %p272, %s271, 15
      %s274 = smul.addr %s273, 2
      %s275 = smul.addr %s274, 4
      %s276 = scalar_lea.vmem %s0, %s275
      %s277 = smul.u32 8, %s18
      %p278 = scmp.lt.s32.totalorder %s18, 1
      %s279 = scalar_select %p278, %s18, 1
      %s280 = smul.addr %s279, 8
      %s281 = scalar_lea.vmem %s7, %s280
      %v283 = vld [vmem:[%s276] sm:$0xf]
      %v284 = vld [vmem:[%s276 + $0x4] sm:$0x1]
      %v285 = vld [vmem:[%s276 + $0x8] sm:$0xf]
      %v286 = vld [vmem:[%s276 + $0xc] sm:$0x1]
      %v287 = vld [vmem:[%s276 + $0x10] sm:$0xf]
      %v288 = vld [vmem:[%s276 + $0x14] sm:$0x1]
      %v289 = vld [vmem:[%s276 + $0x18] sm:$0xf]
      %v290 = vld [vmem:[%s276 + $0x1c] sm:$0x1]
      %v291 = vld [vmem:[%s276 + $0x20] sm:$0xf]
      %v292 = vld [vmem:[%s276 + $0x24] sm:$0x1]
      %v293 = vld [vmem:[%s276 + $0x28] sm:$0xf]
      %v294 = vld [vmem:[%s276 + $0x2c] sm:$0x1]
      %v295 = vld [vmem:[%s276 + $0x30] sm:$0xf]
      %v296 = vld [vmem:[%s276 + $0x34] sm:$0x1]
      %v297 = vld [vmem:[%s276 + $0x38] sm:$0xf]
      %v298 = vld [vmem:[%s276 + $0x3c] sm:$0x1]
      %v299 = vld [vmem:[%s1] sm:$0xf]
      %v300 = vld [vmem:[%s1 + $0x4] sm:$0xf]
      %v301 = vld [vmem:[%s1 + $0x8] sm:$0xf]
      %v302 = vld [vmem:[%s1 + $0xc] sm:$0xf]
      %v303 = vld [vmem:[%s1 + $0x10] sm:$0xf]
      %v304 = vld [vmem:[%s1 + $0x14] sm:$0xf]
      %v305 = vld [vmem:[%s1 + $0x18] sm:$0xf]
      %v306 = vld [vmem:[%s1 + $0x1c] sm:$0xf]
      %v307 = vld [vmem:[%s1 + $0x20] sm:$0xf]
      %v308 = vld [vmem:[%s1 + $0x24] sm:$0xf]
      %v309 = vld [vmem:[%s1 + $0x28] sm:$0xf]
      %v310 = vld [vmem:[%s1 + $0x2c] sm:$0xf]
      %v311 = vld [vmem:[%s1 + $0x30] sm:$0xf]
      %v312 = vld [vmem:[%s1 + $0x34] sm:$0xf]
      %v313 = vld [vmem:[%s1 + $0x38] sm:$0xf]
      %v314 = vld [vmem:[%s1 + $0x3c] sm:$0xf]
      %v315 = vld [vmem:[%s2] sm:$0x1]
      %v317 = vlaneseq
      %v318 = vshrl.u32 %v317, 7
      %v319 = vsub.s32 0, %v318
      %v320 = vrot.slane %v315, %v319
      %v330 = vunpack.c.l.b16 %v283
      %v331 = vunpack.c.l.b16 %v285
      %v332 = vunpack.c.l.b16 %v287
      %v333 = vunpack.c.l.b16 %v289
      %v334 = vunpack.c.l.b16 %v291
      %v335 = vunpack.c.l.b16 %v293
      %v336 = vunpack.c.l.b16 %v295
      %v337 = vunpack.c.l.b16 %v297
      %v338 = vpack.c.b16 %v331, %v330
      %v339 = vpack.c.b16 %v333, %v332
      %v340 = vpack.c.b16 %v335, %v334
      %v341 = vpack.c.b16 %v337, %v336
      %v362 = vunpack.c.l.b16 %v299
      %v363 = vunpack.c.l.b16 %v300
      %v364 = vunpack.c.l.b16 %v301
      %v365 = vunpack.c.l.b16 %v302
      %v366 = vunpack.c.l.b16 %v303
      %v367 = vunpack.c.l.b16 %v304
      %v368 = vunpack.c.l.b16 %v305
      %v369 = vunpack.c.l.b16 %v306
      %v370 = vunpack.c.l.b16 %v307
      %v371 = vunpack.c.l.b16 %v308
      %v372 = vunpack.c.l.b16 %v309
      %v373 = vunpack.c.l.b16 %v310
      %v374 = vunpack.c.l.b16 %v311
      %v375 = vunpack.c.l.b16 %v312
      %v376 = vunpack.c.l.b16 %v313
      %v377 = vunpack.c.l.b16 %v314
      %v378 = vpack.c.b16 %v363, %v362
      %v379 = vpack.c.b16 %v365, %v364
      %v380 = vpack.c.b16 %v367, %v366
      %v381 = vpack.c.b16 %v369, %v368
      %v382 = vpack.c.b16 %v371, %v370
      %v383 = vpack.c.b16 %v373, %v372
      %v384 = vpack.c.b16 %v375, %v374
      %v385 = vpack.c.b16 %v377, %v376
      %394 = vmatprep.subr.bf16.mxu0 0
      %395 = vmatpush1.bf16.msra.mxu0 %v378
      %396 = vmatprep.subr.bf16.mxu0 0
      %397 = vmatpush1.bf16.msra.mxu0 %v379
      %398 = vmatprep.subr.bf16.mxu0 0
      %399 = vmatpush1.bf16.msra.mxu0 %v380
      %400 = vmatprep.subr.bf16.mxu0 0
      %401 = vmatpush1.bf16.msra.mxu0 %v381
      %402 = vmatprep.subr.bf16.mxu0 0
      %403 = vmatpush1.bf16.msra.mxu0 %v382
      %404 = vmatprep.subr.bf16.mxu0 0
      %405 = vmatpush1.bf16.msra.mxu0 %v383
      %406 = vmatprep.subr.bf16.mxu0 0
      %407 = vmatpush1.bf16.msra.mxu0 %v384
      %408 = vmatprep.subr.bf16.mxu0 0
      %409 = vmatpush1.bf16.msra.mxu0 %v385
      %410 = vmatprep.subr.bf16.mxu0 0
      %411 = vmatpush1.bf16.msra.mxu0 0
      %412 = vmatprep.subr.bf16.mxu0 0
      %413 = vmatpush1.bf16.msra.mxu0 0
      %414 = vmatprep.subr.bf16.mxu0 0
      %415 = vmatpush1.bf16.msra.mxu0 0
      %416 = vmatprep.subr.bf16.mxu0 0
      %417 = vmatpush1.bf16.msra.mxu0 0
      %418 = vmatprep.subr.bf16.mxu0 0
      %419 = vmatpush1.bf16.msra.mxu0 0
      %420 = vmatprep.subr.bf16.mxu0 0
      %421 = vmatpush1.bf16.msra.mxu0 0
      %422 = vmatprep.subr.bf16.mxu0 0
      %423 = vmatpush1.bf16.msra.mxu0 0
      %424 = vmatprep.subr.bf16.mxu0 0
      %425 = vmatpush1.bf16.msra.mxu0 0
      %426 = vmatprep.mubr.bf16.mxu0 0
      %427 = vmatmul.mubr.bf16.gmra.mrb[0].mxu0 %v338
      %v428 = vpop.f32.mrb[0].mxu0
      %v429 = vadd.f32 %v320, %v428
      %v430 = vpop.f32.mrb[0].mxu0
      %v431 = vpop.f32.mrb[0].mxu0
      %v432 = vadd.f32 %v320, %v431
      %v433 = vpop.f32.mrb[0].mxu0
      %434 = vmatprep.mubr.bf16.mxu0 0
      %435 = vmatmul.mubr.bf16.gmra.mrb[0].mxu0 %v339
      %v436 = vpop.f32.mrb[0].mxu0
      %v437 = vadd.f32 %v320, %v436
      %v438 = vpop.f32.mrb[0].mxu0
      %v439 = vpop.f32.mrb[0].mxu0
      %v440 = vadd.f32 %v320, %v439
      %v441 = vpop.f32.mrb[0].mxu0
      %442 = vmatprep.mubr.bf16.mxu0 0
      %443 = vmatmul.mubr.bf16.gmra.mrb[0].mxu0 %v340
      %v444 = vpop.f32.mrb[0].mxu0
      %v445 = vadd.f32 %v320, %v444
      %v446 = vpop.f32.mrb[0].mxu0
      %v447 = vpop.f32.mrb[0].mxu0
      %v448 = vadd.f32 %v320, %v447
      %v449 = vpop.f32.mrb[0].mxu0
      %450 = vmatprep.mubr.bf16.mxu0 0
      %451 = vmatmul.mubr.bf16.gmra.mrb[0].mxu0 %v341
      %v452 = vpop.f32.mrb[0].mxu0
      %v453 = vadd.f32 %v320, %v452
      %v454 = vpop.f32.mrb[0].mxu0
      %v455 = vpop.f32.mrb[0].mxu0
      %v456 = vadd.f32 %v320, %v455
      %v457 = vpop.f32.mrb[0].mxu0
      %458 = vdwg.mxu0
      %v459 = vmax.f32 %v429, 0.0
      %v460 = vmax.f32 %v432, 0.0
      %v461 = vmax.f32 %v437, 0.0
      %v462 = vmax.f32 %v440, 0.0
      %v463 = vmax.f32 %v445, 0.0
      %v464 = vmax.f32 %v448, 0.0
      %v465 = vmax.f32 %v453, 0.0
      %v466 = vmax.f32 %v456, 0.0
      %v467 = vrot.slane %v459, 4
      %v468 = vmax.f32 %v459, %v467
      %v469 = vrot.slane %v468, 2
      %v470 = vmax.f32 %v468, %v469
      %v471 = vrot.slane %v470, 1
      %v472 = vmax.f32 %v470, %v471
      %v473 = vrot.slane %v460, 4
      %v474 = vmax.f32 %v460, %v473
      %v475 = vrot.slane %v474, 2
      %v476 = vmax.f32 %v474, %v475
      %v477 = vrot.slane %v476, 1
      %v478 = vmax.f32 %v476, %v477
      %v479 = vrot.slane %v461, 4
      %v480 = vmax.f32 %v461, %v479
      %v481 = vrot.slane %v480, 2
      %v482 = vmax.f32 %v480, %v481
      %v483 = vrot.slane %v482, 1
      %v484 = vmax.f32 %v482, %v483
      %v485 = vrot.slane %v462, 4
      %v486 = vmax.f32 %v462, %v485
      %v487 = vrot.slane %v486, 2
      %v488 = vmax.f32 %v486, %v487
      %v489 = vrot.slane %v488, 1
      %v490 = vmax.f32 %v488, %v489
      %v491 = vrot.slane %v463, 4
      %v492 = vmax.f32 %v463, %v491
      %v493 = vrot.slane %v492, 2
      %v494 = vmax.f32 %v492, %v493
      %v495 = vrot.slane %v494, 1
      %v496 = vmax.f32 %v494, %v495
      %v497 = vrot.slane %v464, 4
      %v498 = vmax.f32 %v464, %v497
      %v499 = vrot.slane %v498, 2
      %v500 = vmax.f32 %v498, %v499
      %v501 = vrot.slane %v500, 1
      %v502 = vmax.f32 %v500, %v501
      %v503 = vrot.slane %v465, 4
      %v504 = vmax.f32 %v465, %v503
      %v505 = vrot.slane %v504, 2
      %v506 = vmax.f32 %v504, %v505
      %v507 = vrot.slane %v506, 1
      %v508 = vmax.f32 %v506, %v507
      %v509 = vrot.slane %v466, 4
      %v510 = vmax.f32 %v466, %v509
      %v511 = vrot.slane %v510, 2
      %v512 = vmax.f32 %v510, %v511
      %v513 = vrot.slane %v512, 1
      %v514 = vmax.f32 %v512, %v513
      %v523 = vunpack.c.l.b16 %v284
      %v524 = vunpack.c.l.b16 %v286
      %v525 = vunpack.c.l.b16 %v288
      %v526 = vunpack.c.l.b16 %v290
      %v527 = vunpack.c.l.b16 %v292
      %v528 = vunpack.c.l.b16 %v294
      %v529 = vunpack.c.l.b16 %v296
      %v530 = vunpack.c.l.b16 %v298
      %v531 = vpack.c.b16 %v523, %v330
      %v532 = vpack.c.b16 %v524, %v331
      %v533 = vpack.c.b16 %v525, %v332
      %v534 = vpack.c.b16 %v526, %v333
      %v535 = vpack.c.b16 %v527, %v334
      %v536 = vpack.c.b16 %v528, %v335
      %v537 = vpack.c.b16 %v529, %v336
      %v538 = vpack.c.b16 %v530, %v337
      %v540 = vshrl.u32 %v531, 16
      %v542 = vshll.u32 %v531, 16
      %v544 = vrot.slane %v542, 1
      %v545 = vor.u32 %v540, %v544
      %v547 = vshrl.u32 %v532, 16
      %v549 = vshll.u32 %v532, 16
      %v551 = vrot.slane %v549, 1
      %v552 = vor.u32 %v547, %v551
      %v554 = vshrl.u32 %v533, 16
      %v556 = vshll.u32 %v533, 16
      %v558 = vrot.slane %v556, 1
      %v559 = vor.u32 %v554, %v558
      %v561 = vshrl.u32 %v534, 16
      %v563 = vshll.u32 %v534, 16
      %v565 = vrot.slane %v563, 1
      %v566 = vor.u32 %v561, %v565
      %v568 = vshrl.u32 %v535, 16
      %v570 = vshll.u32 %v535, 16
      %v572 = vrot.slane %v570, 1
      %v573 = vor.u32 %v568, %v572
      %v575 = vshrl.u32 %v536, 16
      %v577 = vshll.u32 %v536, 16
      %v579 = vrot.slane %v577, 1
      %v580 = vor.u32 %v575, %v579
      %v582 = vshrl.u32 %v537, 16
      %v584 = vshll.u32 %v537, 16
      %v586 = vrot.slane %v584, 1
      %v587 = vor.u32 %v582, %v586
      %v589 = vshrl.u32 %v538, 16
      %v591 = vshll.u32 %v538, 16
      %v593 = vrot.slane %v591, 1
      %v594 = vor.u32 %v589, %v593
      %v595 = vrot.slane %v531, 1
      %v596 = vrot.slane %v532, 1
      %v597 = vrot.slane %v533, 1
      %v598 = vrot.slane %v534, 1
      %v599 = vrot.slane %v535, 1
      %v600 = vrot.slane %v536, 1
      %v601 = vrot.slane %v537, 1
      %v602 = vrot.slane %v538, 1
      %v603 = vunpack.c.l.b16 %v545
      %v604 = vunpack.c.l.b16 %v595
      %v605 = vunpack.c.l.b16 %v552
      %v606 = vunpack.c.l.b16 %v596
      %v607 = vunpack.c.l.b16 %v559
      %v608 = vunpack.c.l.b16 %v597
      %v609 = vunpack.c.l.b16 %v566
      %v610 = vunpack.c.l.b16 %v598
      %v611 = vunpack.c.l.b16 %v573
      %v612 = vunpack.c.l.b16 %v599
      %v613 = vunpack.c.l.b16 %v580
      %v614 = vunpack.c.l.b16 %v600
      %v615 = vunpack.c.l.b16 %v587
      %v616 = vunpack.c.l.b16 %v601
      %v617 = vunpack.c.l.b16 %v594
      %v618 = vunpack.c.l.b16 %v602
      %v619 = vld [vmem:[%s3] sm:$0xf]
      %v620 = vld [vmem:[%s3 + $0x4] sm:$0xf]
      %v621 = vld [vmem:[%s3 + $0x8] sm:$0xf]
      %v622 = vld [vmem:[%s3 + $0xc] sm:$0xf]
      %v623 = vld [vmem:[%s3 + $0x10] sm:$0xf]
      %v624 = vld [vmem:[%s3 + $0x14] sm:$0xf]
      %v625 = vld [vmem:[%s3 + $0x18] sm:$0xf]
      %v626 = vld [vmem:[%s3 + $0x1c] sm:$0xf]
      %v627 = vld [vmem:[%s3 + $0x20] sm:$0xf]
      %v628 = vld [vmem:[%s3 + $0x24] sm:$0xf]
      %v629 = vld [vmem:[%s3 + $0x28] sm:$0xf]
      %v630 = vld [vmem:[%s3 + $0x2c] sm:$0xf]
      %v631 = vld [vmem:[%s3 + $0x30] sm:$0xf]
      %v632 = vld [vmem:[%s3 + $0x34] sm:$0xf]
      %v633 = vld [vmem:[%s3 + $0x38] sm:$0xf]
      %v634 = vld [vmem:[%s3 + $0x3c] sm:$0xf]
      %v635 = vld [vmem:[%s3 + $0x40] sm:$0xf]
      %v636 = vld [vmem:[%s3 + $0x44] sm:$0xf]
      %v637 = vld [vmem:[%s3 + $0x48] sm:$0xf]
      %v638 = vld [vmem:[%s3 + $0x4c] sm:$0xf]
      %v639 = vld [vmem:[%s3 + $0x50] sm:$0xf]
      %v640 = vld [vmem:[%s3 + $0x54] sm:$0xf]
      %v641 = vld [vmem:[%s3 + $0x58] sm:$0xf]
      %v642 = vld [vmem:[%s3 + $0x5c] sm:$0xf]
      %v643 = vld [vmem:[%s3 + $0x60] sm:$0xf]
      %v644 = vld [vmem:[%s3 + $0x64] sm:$0xf]
      %v645 = vld [vmem:[%s3 + $0x68] sm:$0xf]
      %v646 = vld [vmem:[%s3 + $0x6c] sm:$0xf]
      %v647 = vld [vmem:[%s3 + $0x70] sm:$0xf]
      %v648 = vld [vmem:[%s3 + $0x74] sm:$0xf]
      %v649 = vld [vmem:[%s3 + $0x78] sm:$0xf]
      %v650 = vld [vmem:[%s3 + $0x7c] sm:$0xf]
      %v651 = vld [vmem:[%s3 + $0x80] sm:$0xf]
      %v652 = vld [vmem:[%s3 + $0x84] sm:$0xf]
      %v653 = vld [vmem:[%s3 + $0x88] sm:$0xf]
      %v654 = vld [vmem:[%s3 + $0x8c] sm:$0xf]
      %v655 = vld [vmem:[%s3 + $0x90] sm:$0xf]
      %v656 = vld [vmem:[%s3 + $0x94] sm:$0xf]
      %v657 = vld [vmem:[%s3 + $0x98] sm:$0xf]
      %v658 = vld [vmem:[%s3 + $0x9c] sm:$0xf]
      %v659 = vld [vmem:[%s3 + $0xa0] sm:$0xf]
      %v660 = vld [vmem:[%s3 + $0xa4] sm:$0xf]
      %v661 = vld [vmem:[%s3 + $0xa8] sm:$0xf]
      %v662 = vld [vmem:[%s3 + $0xac] sm:$0xf]
      %v663 = vld [vmem:[%s3 + $0xb0] sm:$0xf]
      %v664 = vld [vmem:[%s3 + $0xb4] sm:$0xf]
      %v665 = vld [vmem:[%s3 + $0xb8] sm:$0xf]
      %v666 = vld [vmem:[%s3 + $0xbc] sm:$0xf]
      %v667 = vld [vmem:[%s4] sm:$0x1]
      %v669 = vlaneseq
      %v670 = vshrl.u32 %v669, 7
      %v671 = vsub.s32 0, %v670
      %v672 = vrot.slane %v667, %v671
      %v674 = vpack.c.b16 %v605, %v603
      %v675 = vpack.c.b16 %v606, %v604
      %v676 = vpack.c.b16 %v609, %v607
      %v677 = vpack.c.b16 %v610, %v608
      %v678 = vpack.c.b16 %v613, %v611
      %v679 = vpack.c.b16 %v614, %v612
      %v680 = vpack.c.b16 %v617, %v615
      %v681 = vpack.c.b16 %v618, %v616
      %v738 = vunpack.c.l.b16 %v619
      %v739 = vunpack.c.l.b16 %v620
      %v740 = vunpack.c.l.b16 %v621
      %v741 = vunpack.c.l.b16 %v622
      %v742 = vunpack.c.l.b16 %v623
      %v743 = vunpack.c.l.b16 %v624
      %v744 = vunpack.c.l.b16 %v625
      %v745 = vunpack.c.l.b16 %v626
      %v746 = vunpack.c.l.b16 %v627
      %v747 = vunpack.c.l.b16 %v628
      %v748 = vunpack.c.l.b16 %v629
      %v749 = vunpack.c.l.b16 %v630
      %v750 = vunpack.c.l.b16 %v631
      %v751 = vunpack.c.l.b16 %v632
      %v752 = vunpack.c.l.b16 %v633
      %v753 = vunpack.c.l.b16 %v634
      %v754 = vunpack.c.l.b16 %v635
      %v755 = vunpack.c.l.b16 %v636
      %v756 = vunpack.c.l.b16 %v637
      %v757 = vunpack.c.l.b16 %v638
      %v758 = vunpack.c.l.b16 %v639
      %v759 = vunpack.c.l.b16 %v640
      %v760 = vunpack.c.l.b16 %v641
      %v761 = vunpack.c.l.b16 %v642
      %v762 = vunpack.c.l.b16 %v643
      %v763 = vunpack.c.l.b16 %v644
      %v764 = vunpack.c.l.b16 %v645
      %v765 = vunpack.c.l.b16 %v646
      %v766 = vunpack.c.l.b16 %v647
      %v767 = vunpack.c.l.b16 %v648
      %v768 = vunpack.c.l.b16 %v649
      %v769 = vunpack.c.l.b16 %v650
      %v770 = vunpack.c.l.b16 %v651
      %v771 = vunpack.c.l.b16 %v652
      %v772 = vunpack.c.l.b16 %v653
      %v773 = vunpack.c.l.b16 %v654
      %v774 = vunpack.c.l.b16 %v655
      %v775 = vunpack.c.l.b16 %v656
      %v776 = vunpack.c.l.b16 %v657
      %v777 = vunpack.c.l.b16 %v658
      %v778 = vunpack.c.l.b16 %v659
      %v779 = vunpack.c.l.b16 %v660
      %v780 = vunpack.c.l.b16 %v661
      %v781 = vunpack.c.l.b16 %v662
      %v782 = vunpack.c.l.b16 %v663
      %v783 = vunpack.c.l.b16 %v664
      %v784 = vunpack.c.l.b16 %v665
      %v785 = vunpack.c.l.b16 %v666
      %v786 = vpack.c.b16 %v739, %v738
      %v787 = vpack.c.b16 %v741, %v740
      %v788 = vpack.c.b16 %v743, %v742
      %v789 = vpack.c.b16 %v745, %v744
      %v790 = vpack.c.b16 %v747, %v746
      %v791 = vpack.c.b16 %v749, %v748
      %v792 = vpack.c.b16 %v751, %v750
      %v793 = vpack.c.b16 %v753, %v752
      %v794 = vpack.c.b16 %v755, %v754
      %v795 = vpack.c.b16 %v757, %v756
      %v796 = vpack.c.b16 %v759, %v758
      %v797 = vpack.c.b16 %v761, %v760
      %v798 = vpack.c.b16 %v763, %v762
      %v799 = vpack.c.b16 %v765, %v764
      %v800 = vpack.c.b16 %v767, %v766
      %v801 = vpack.c.b16 %v769, %v768
      %v802 = vpack.c.b16 %v771, %v770
      %v803 = vpack.c.b16 %v773, %v772
      %v804 = vpack.c.b16 %v775, %v774
      %v805 = vpack.c.b16 %v777, %v776
      %v806 = vpack.c.b16 %v779, %v778
      %v807 = vpack.c.b16 %v781, %v780
      %v808 = vpack.c.b16 %v783, %v782
      %v809 = vpack.c.b16 %v785, %v784
      %834 = vmatprep.subr.bf16.mxu0 0
      %835 = vmatpush1.bf16.msra.mxu0 %v786
      %836 = vmatprep.subr.bf16.mxu0 0
      %837 = vmatpush1.bf16.msra.mxu0 %v787
      %838 = vmatprep.subr.bf16.mxu0 0
      %839 = vmatpush1.bf16.msra.mxu0 %v788
      %840 = vmatprep.subr.bf16.mxu0 0
      %841 = vmatpush1.bf16.msra.mxu0 %v789
      %842 = vmatprep.subr.bf16.mxu0 0
      %843 = vmatpush1.bf16.msra.mxu0 %v790
      %844 = vmatprep.subr.bf16.mxu0 0
      %845 = vmatpush1.bf16.msra.mxu0 %v791
      %846 = vmatprep.subr.bf16.mxu0 0
      %847 = vmatpush1.bf16.msra.mxu0 %v792
      %848 = vmatprep.subr.bf16.mxu0 0
      %849 = vmatpush1.bf16.msra.mxu0 %v793
      %850 = vmatprep.subr.bf16.mxu0 0
      %851 = vmatpush1.bf16.msra.mxu0 %v794
      %852 = vmatprep.subr.bf16.mxu0 0
      %853 = vmatpush1.bf16.msra.mxu0 %v795
      %854 = vmatprep.subr.bf16.mxu0 0
      %855 = vmatpush1.bf16.msra.mxu0 %v796
      %856 = vmatprep.subr.bf16.mxu0 0
      %857 = vmatpush1.bf16.msra.mxu0 %v797
      %858 = vmatprep.subr.bf16.mxu0 0
      %859 = vmatpush1.bf16.msra.mxu0 %v798
      %860 = vmatprep.subr.bf16.mxu0 0
      %861 = vmatpush1.bf16.msra.mxu0 %v799
      %862 = vmatprep.subr.bf16.mxu0 0
      %863 = vmatpush1.bf16.msra.mxu0 %v800
      %864 = vmatprep.subr.bf16.mxu0 0
      %865 = vmatpush1.bf16.msra.mxu0 %v801
      %866 = vmatprep.mubr.bf16.mxu0 %v674
      %867 = vmatmul.mubr.bf16.gmra.mrb[0].mxu0 %v338
      %v868 = vpop.f32.mrb[0].mxu0
      %v869 = vadd.f32 %v672, %v868
      %v870 = vpop.f32.mrb[0].mxu0
      %v871 = vpop.f32.mrb[0].mxu0
      %v872 = vadd.f32 %v672, %v871
      %v873 = vpop.f32.mrb[0].mxu0
      %874 = vmatprep.mubr.bf16.mxu0 %v676
      %875 = vmatmul.mubr.bf16.gmra.mrb[0].mxu0 %v339
      %v876 = vpop.f32.mrb[0].mxu0
      %v877 = vadd.f32 %v672, %v876
      %v878 = vpop.f32.mrb[0].mxu0
      %v879 = vpop.f32.mrb[0].mxu0
      %v880 = vadd.f32 %v672, %v879
      %v881 = vpop.f32.mrb[0].mxu0
      %882 = vmatprep.mubr.bf16.mxu0 %v678
      %883 = vmatmul.mubr.bf16.gmra.mrb[0].mxu0 %v340
      %v884 = vpop.f32.mrb[0].mxu0
      %v885 = vadd.f32 %v672, %v884
      %v886 = vpop.f32.mrb[0].mxu0
      %v887 = vpop.f32.mrb[0].mxu0
      %v888 = vadd.f32 %v672, %v887
      %v889 = vpop.f32.mrb[0].mxu0
      %890 = vmatprep.mubr.bf16.mxu0 %v680
      %891 = vmatmul.mubr.bf16.gmra.mrb[0].mxu0 %v341
      %v892 = vpop.f32.mrb[0].mxu0
      %v893 = vadd.f32 %v672, %v892
      %v894 = vpop.f32.mrb[0].mxu0
      %v895 = vpop.f32.mrb[0].mxu0
      %v896 = vadd.f32 %v672, %v895
      %v897 = vpop.f32.mrb[0].mxu0
      %898 = vdwg.mxu0
      %899 = vmatprep.subr.bf16.mxu0 0
      %900 = vmatpush1.bf16.msra.mxu0 %v802
      %901 = vmatprep.subr.bf16.mxu0 0
      %902 = vmatpush1.bf16.msra.mxu0 %v803
      %903 = vmatprep.subr.bf16.mxu0 0
      %904 = vmatpush1.bf16.msra.mxu0 %v804
      %905 = vmatprep.subr.bf16.mxu0 0
      %906 = vmatpush1.bf16.msra.mxu0 %v805
      %907 = vmatprep.subr.bf16.mxu0 0
      %908 = vmatpush1.bf16.msra.mxu0 %v806
      %909 = vmatprep.subr.bf16.mxu0 0
      %910 = vmatpush1.bf16.msra.mxu0 %v807
      %911 = vmatprep.subr.bf16.mxu0 0
      %912 = vmatpush1.bf16.msra.mxu0 %v808
      %913 = vmatprep.subr.bf16.mxu0 0
      %914 = vmatpush1.bf16.msra.mxu0 %v809
      %915 = vmatprep.subr.bf16.mxu0 0
      %916 = vmatpush1.bf16.msra.mxu0 0
      %917 = vmatprep.subr.bf16.mxu0 0
      %918 = vmatpush1.bf16.msra.mxu0 0
      %919 = vmatprep.subr.bf16.mxu0 0
      %920 = vmatpush1.bf16.msra.mxu0 0
      %921 = vmatprep.subr.bf16.mxu0 0
      %922 = vmatpush1.bf16.msra.mxu0 0
      %923 = vmatprep.subr.bf16.mxu0 0
      %924 = vmatpush1.bf16.msra.mxu0 0
      %925 = vmatprep.subr.bf16.mxu0 0
      %926 = vmatpush1.bf16.msra.mxu0 0
      %927 = vmatprep.subr.bf16.mxu0 0
      %928 = vmatpush1.bf16.msra.mxu0 0
      %929 = vmatprep.subr.bf16.mxu0 0
      %930 = vmatpush1.bf16.msra.mxu0 0
      %931 = vmatprep.mubr.bf16.mxu0 0
      %932 = vmatmul.mubr.bf16.gmra.mrb[0].mxu0 %v675
      %v933 = vpop.f32.mrb[0].mxu0
      %v934 = vadd.f32 %v869, %v933
      %v935 = vpop.f32.mrb[0].mxu0
      %v936 = vpop.f32.mrb[0].mxu0
      %v937 = vadd.f32 %v872, %v936
      %v938 = vpop.f32.mrb[0].mxu0
      %939 = vmatprep.mubr.bf16.mxu0 0
      %940 = vmatmul.mubr.bf16.gmra.mrb[0].mxu0 %v677
      %v941 = vpop.f32.mrb[0].mxu0
      %v942 = vadd.f32 %v877, %v941
      %v943 = vpop.f32.mrb[0].mxu0
      %v944 = vpop.f32.mrb[0].mxu0
      %v945 = vadd.f32 %v880, %v944
      %v946 = vpop.f32.mrb[0].mxu0
      %947 = vmatprep.mubr.bf16.mxu0 0
      %948 = vmatmul.mubr.bf16.gmra.mrb[0].mxu0 %v679
      %v949 = vpop.f32.mrb[0].mxu0
      %v950 = vadd.f32 %v885, %v949
      %v951 = vpop.f32.mrb[0].mxu0
      %v952 = vpop.f32.mrb[0].mxu0
      %v953 = vadd.f32 %v888, %v952
      %v954 = vpop.f32.mrb[0].mxu0
      %955 = vmatprep.mubr.bf16.mxu0 0
      %956 = vmatmul.mubr.bf16.gmra.mrb[0].mxu0 %v681
      %v957 = vpop.f32.mrb[0].mxu0
      %v958 = vadd.f32 %v893, %v957
      %v959 = vpop.f32.mrb[0].mxu0
      %v960 = vpop.f32.mrb[0].mxu0
      %v961 = vadd.f32 %v896, %v960
      %v962 = vpop.f32.mrb[0].mxu0
      %963 = vdwg.mxu0
      %v964 = vmax.f32 %v934, 0.0
      %v965 = vmax.f32 %v937, 0.0
      %v966 = vmax.f32 %v942, 0.0
      %v967 = vmax.f32 %v945, 0.0
      %v968 = vmax.f32 %v950, 0.0
      %v969 = vmax.f32 %v953, 0.0
      %v970 = vmax.f32 %v958, 0.0
      %v971 = vmax.f32 %v961, 0.0
      %v972 = vlaneseq
      %v973 = vshrl.u32 %v972, 7
      %vm974 = vcmp.lt.s32.totalorder %v973, 6
      %v975 = vsel %vm974, %v964, -inf
      %v976 = vsel %vm974, %v965, -inf
      %v977 = vsel %vm974, %v966, -inf
      %v978 = vsel %vm974, %v967, -inf
      %v979 = vsel %vm974, %v968, -inf
      %v980 = vsel %vm974, %v969, -inf
      %v981 = vsel %vm974, %v970, -inf
      %v982 = vsel %vm974, %v971, -inf
      %v983 = vrot.slane %v975, 4
      %v984 = vmax.f32 %v975, %v983
      %v985 = vrot.slane %v984, 2
      %v986 = vmax.f32 %v984, %v985
      %v987 = vrot.slane %v986, 1
      %v988 = vmax.f32 %v986, %v987
      %v989 = vrot.slane %v976, 4
      %v990 = vmax.f32 %v976, %v989
      %v991 = vrot.slane %v990, 2
      %v992 = vmax.f32 %v990, %v991
      %v993 = vrot.slane %v992, 1
      %v994 = vmax.f32 %v992, %v993
      %v995 = vrot.slane %v977, 4
      %v996 = vmax.f32 %v977, %v995
      %v997 = vrot.slane %v996, 2
      %v998 = vmax.f32 %v996, %v997
      %v999 = vrot.slane %v998, 1
      %v1000 = vmax.f32 %v998, %v999
      %v1001 = vrot.slane %v978, 4
      %v1002 = vmax.f32 %v978, %v1001
      %v1003 = vrot.slane %v1002, 2
      %v1004 = vmax.f32 %v1002, %v1003
      %v1005 = vrot.slane %v1004, 1
      %v1006 = vmax.f32 %v1004, %v1005
      %v1007 = vrot.slane %v979, 4
      %v1008 = vmax.f32 %v979, %v1007
      %v1009 = vrot.slane %v1008, 2
      %v1010 = vmax.f32 %v1008, %v1009
      %v1011 = vrot.slane %v1010, 1
      %v1012 = vmax.f32 %v1010, %v1011
      %v1013 = vrot.slane %v980, 4
      %v1014 = vmax.f32 %v980, %v1013
      %v1015 = vrot.slane %v1014, 2
      %v1016 = vmax.f32 %v1014, %v1015
      %v1017 = vrot.slane %v1016, 1
      %v1018 = vmax.f32 %v1016, %v1017
      %v1019 = vrot.slane %v981, 4
      %v1020 = vmax.f32 %v981, %v1019
      %v1021 = vrot.slane %v1020, 2
      %v1022 = vmax.f32 %v1020, %v1021
      %v1023 = vrot.slane %v1022, 1
      %v1024 = vmax.f32 %v1022, %v1023
      %v1025 = vrot.slane %v982, 4
      %v1026 = vmax.f32 %v982, %v1025
      %v1027 = vrot.slane %v1026, 2
      %v1028 = vmax.f32 %v1026, %v1027
      %v1029 = vrot.slane %v1028, 1
      %v1030 = vmax.f32 %v1028, %v1029
      %vm1039 = vcmask 1041409
      %v1040 = vsel %vm1039, %v478, %v472
      %vm1041 = vcmask 1042434
      %v1042 = vsel %vm1041, %v484, %v1040
      %vm1043 = vcmask 1043459
      %v1044 = vsel %vm1043, %v490, %v1042
      %vm1045 = vcmask 1044484
      %v1046 = vsel %vm1045, %v496, %v1044
      %vm1047 = vcmask 1045509
      %v1048 = vsel %vm1047, %v502, %v1046
      %vm1049 = vcmask 1046534
      %v1050 = vsel %vm1049, %v508, %v1048
      %vm1051 = vcmask 1047559
      %v1052 = vsel %vm1051, %v514, %v1050
      %v1062 = vsel %vm1039, %v994, %v988
      %v1063 = vsel %vm1041, %v1000, %v1062
      %v1064 = vsel %vm1043, %v1006, %v1063
      %v1065 = vsel %vm1045, %v1012, %v1064
      %v1066 = vsel %vm1047, %v1018, %v1065
      %v1067 = vsel %vm1049, %v1024, %v1066
      %v1068 = vsel %vm1051, %v1030, %v1067
      %v1070 = vpack.c.bf16 %v1052, %v1052
      %v1071 = vpack.c.bf16 %v1068, %v1068
      %v1072 = vld [vmem:[%s5] sm:$0xf]
      %v1073 = vld [vmem:[%s5 + $0x4] sm:$0xf]
      %v1074 = vld [vmem:[%s5 + $0x8] sm:$0xf]
      %v1075 = vld [vmem:[%s5 + $0xc] sm:$0xf]
      %v1076 = vld [vmem:[%s5 + $0x10] sm:$0xf]
      %v1077 = vld [vmem:[%s5 + $0x14] sm:$0xf]
      %v1078 = vld [vmem:[%s5 + $0x18] sm:$0xf]
      %v1079 = vld [vmem:[%s5 + $0x1c] sm:$0xf]
      %v1080 = vld [vmem:[%s5 + $0x20] sm:$0xf]
      %v1081 = vld [vmem:[%s5 + $0x24] sm:$0xf]
      %v1082 = vld [vmem:[%s5 + $0x28] sm:$0xf]
      %v1083 = vld [vmem:[%s5 + $0x2c] sm:$0xf]
      %v1084 = vld [vmem:[%s5 + $0x30] sm:$0xf]
      %v1085 = vld [vmem:[%s5 + $0x34] sm:$0xf]
      %v1086 = vld [vmem:[%s5 + $0x38] sm:$0xf]
      %v1087 = vld [vmem:[%s5 + $0x3c] sm:$0xf]
      %v1088 = vld [vmem:[%s5 + $0x40] sm:$0xf]
      %v1089 = vld [vmem:[%s5 + $0x44] sm:$0xf]
      %v1090 = vld [vmem:[%s5 + $0x48] sm:$0xf]
      %v1091 = vld [vmem:[%s5 + $0x4c] sm:$0xf]
      %v1092 = vld [vmem:[%s5 + $0x50] sm:$0xf]
      %v1093 = vld [vmem:[%s5 + $0x54] sm:$0xf]
      %v1094 = vld [vmem:[%s5 + $0x58] sm:$0xf]
      %v1095 = vld [vmem:[%s5 + $0x5c] sm:$0xf]
      %v1096 = vld [vmem:[%s5 + $0x60] sm:$0xf]
      %v1097 = vld [vmem:[%s5 + $0x64] sm:$0xf]
      %v1098 = vld [vmem:[%s5 + $0x68] sm:$0xf]
      %v1099 = vld [vmem:[%s5 + $0x6c] sm:$0xf]
      %v1100 = vld [vmem:[%s5 + $0x70] sm:$0xf]
      %v1101 = vld [vmem:[%s5 + $0x74] sm:$0xf]
      %v1102 = vld [vmem:[%s5 + $0x78] sm:$0xf]
      %v1103 = vld [vmem:[%s5 + $0x7c] sm:$0xf]
      %v1104 = vld [vmem:[%s6] sm:$0x1]
      %v1106 = vlaneseq
      %v1107 = vshrl.u32 %v1106, 7
      %v1108 = vsub.s32 0, %v1107
      %v1109 = vrot.slane %v1104, %v1108
      %v1143 = vunpack.c.l.b16 %v1072
      %v1144 = vunpack.c.l.b16 %v1073
      %v1145 = vunpack.c.l.b16 %v1074
      %v1146 = vunpack.c.l.b16 %v1075
      %v1147 = vunpack.c.l.b16 %v1076
      %v1148 = vunpack.c.l.b16 %v1077
      %v1149 = vunpack.c.l.b16 %v1078
      %v1150 = vunpack.c.l.b16 %v1079
      %v1151 = vunpack.c.l.b16 %v1080
      %v1152 = vunpack.c.l.b16 %v1081
      %v1153 = vunpack.c.l.b16 %v1082
      %v1154 = vunpack.c.l.b16 %v1083
      %v1155 = vunpack.c.l.b16 %v1084
      %v1156 = vunpack.c.l.b16 %v1085
      %v1157 = vunpack.c.l.b16 %v1086
      %v1158 = vunpack.c.l.b16 %v1087
      %v1159 = vunpack.c.l.b16 %v1088
      %v1160 = vunpack.c.l.b16 %v1089
      %v1161 = vunpack.c.l.b16 %v1090
      %v1162 = vunpack.c.l.b16 %v1091
      %v1163 = vunpack.c.l.b16 %v1092
      %v1164 = vunpack.c.l.b16 %v1093
      %v1165 = vunpack.c.l.b16 %v1094
      %v1166 = vunpack.c.l.b16 %v1095
      %v1167 = vunpack.c.l.b16 %v1096
      %v1168 = vunpack.c.l.b16 %v1097
      %v1169 = vunpack.c.l.b16 %v1098
      %v1170 = vunpack.c.l.b16 %v1099
      %v1171 = vunpack.c.l.b16 %v1100
      %v1172 = vunpack.c.l.b16 %v1101
      %v1173 = vunpack.c.l.b16 %v1102
      %v1174 = vunpack.c.l.b16 %v1103
      %v1175 = vpack.c.b16 %v1144, %v1143
      %v1176 = vpack.c.b16 %v1146, %v1145
      %v1177 = vpack.c.b16 %v1148, %v1147
      %v1178 = vpack.c.b16 %v1150, %v1149
      %v1179 = vpack.c.b16 %v1152, %v1151
      %v1180 = vpack.c.b16 %v1154, %v1153
      %v1181 = vpack.c.b16 %v1156, %v1155
      %v1182 = vpack.c.b16 %v1158, %v1157
      %v1183 = vpack.c.b16 %v1160, %v1159
      %v1184 = vpack.c.b16 %v1162, %v1161
      %v1185 = vpack.c.b16 %v1164, %v1163
      %v1186 = vpack.c.b16 %v1166, %v1165
      %v1187 = vpack.c.b16 %v1168, %v1167
      %v1188 = vpack.c.b16 %v1170, %v1169
      %v1189 = vpack.c.b16 %v1172, %v1171
      %v1190 = vpack.c.b16 %v1174, %v1173
      %1207 = vmatprep.subr.bf16.mxu0 0
      %1208 = vmatpush1.bf16.msra.mxu0 %v1175
      %1209 = vmatprep.subr.bf16.mxu0 0
      %1210 = vmatpush1.bf16.msra.mxu0 %v1176
      %1211 = vmatprep.subr.bf16.mxu0 0
      %1212 = vmatpush1.bf16.msra.mxu0 %v1177
      %1213 = vmatprep.subr.bf16.mxu0 0
      %1214 = vmatpush1.bf16.msra.mxu0 %v1178
      %1215 = vmatprep.subr.bf16.mxu0 0
      %1216 = vmatpush1.bf16.msra.mxu0 %v1179
      %1217 = vmatprep.subr.bf16.mxu0 0
      %1218 = vmatpush1.bf16.msra.mxu0 %v1180
      %1219 = vmatprep.subr.bf16.mxu0 0
      %1220 = vmatpush1.bf16.msra.mxu0 %v1181
      %1221 = vmatprep.subr.bf16.mxu0 0
      %1222 = vmatpush1.bf16.msra.mxu0 %v1182
      %1223 = vmatprep.subr.bf16.mxu0 0
      %1224 = vmatpush1.bf16.msra.mxu0 %v1183
      %1225 = vmatprep.subr.bf16.mxu0 0
      %1226 = vmatpush1.bf16.msra.mxu0 %v1184
      %1227 = vmatprep.subr.bf16.mxu0 0
      %1228 = vmatpush1.bf16.msra.mxu0 %v1185
      %1229 = vmatprep.subr.bf16.mxu0 0
      %1230 = vmatpush1.bf16.msra.mxu0 %v1186
      %1231 = vmatprep.subr.bf16.mxu0 0
      %1232 = vmatpush1.bf16.msra.mxu0 %v1187
      %1233 = vmatprep.subr.bf16.mxu0 0
      %1234 = vmatpush1.bf16.msra.mxu0 %v1188
      %1235 = vmatprep.subr.bf16.mxu0 0
      %1236 = vmatpush1.bf16.msra.mxu0 %v1189
      %1237 = vmatprep.subr.bf16.mxu0 0
      %1238 = vmatpush1.bf16.msra.mxu0 %v1190
      %1239 = vmatprep.mubr.bf16.mxu0 %v1071
      %1240 = vmatmul.mubr.bf16.gmra.mrb[0].mxu0 %v1070
      %v1241 = vpop.f32.mrb[0].mxu0
      %v1242 = vadd.f32 %v1109, %v1241
      %v1243 = vpop.f32.mrb[0].mxu0
      %v1244 = vpop.f32.mrb[0].mxu0
      %v1245 = vpop.f32.mrb[0].mxu0
      %1246 = vdwg.mxu0
      %vm1247 = vcmask 15360
      %1248 = vst.msk [vmem:[%s281] sm:$0xff] %vm1247, %v1242
      %p1249 = scmp.lt.s32.totalorder %s18, 1
      %s1250 = scalar_select %p1249, %s18, 1
      %s1251 = smul.addr %s1250, 8
      %s1252 = scalar_lea.vmem %s7, %s1251
      // Predicated region
      $region49: #{tpu_custom_call.1} parent=47 // pred_check
        %p1253 = pneg %p188
      $region50: #{tpu_custom_call.1} parent=47 // pred_check_branch
        %1255 = sbr.rel (%p1253) target = $region52
      $region51: #{tpu_custom_call.1} parent=47 // pred_region
        _
      $region52: #{tpu_custom_call.1} parent=47 // pred_fallthru
        _
    $region48: #{tpu_custom_call.1} parent=5 // pred_fallthru
      _
    %p1256 = scmp.le.s32.totalorder 2, %s13
    // Predicated region
    $region53: #{tpu_custom_call.1} parent=5 // pred_check
      %p1257 = pneg %p1256
    $region54: #{tpu_custom_call.1} parent=5 // pred_check_branch
      %1259 = sbr.rel (%p1257) target = $region56
    $region55: #{tpu_custom_call.1} parent=5 // pred_region
      %s1260 = ssub.s32 %s13, 2
      // Predicated region
      $region57: #{tpu_custom_call.1} parent=55 // pred_check
        %p1261 = pneg %p194
      $region58: #{tpu_custom_call.1} parent=55 // pred_check_branch
        %1263 = sbr.rel (%p1261) target = $region60
      $region59: #{tpu_custom_call.1} parent=55 // pred_region
        %p1264 = scmp.lt.s32.totalorder %s19, 1
        %s1265 = scalar_select %p1264, %s19, 1
        %s1266 = smul.addr %s1265, 8
        %s1267 = scalar_lea.vmem %s7, %s1266
      $region60: #{tpu_custom_call.1} parent=55 // pred_fallthru
        _
    $region56: #{tpu_custom_call.1} parent=5 // pred_fallthru
      _
  $region6: #{tpu_custom_call.1} parent=0 // loop_footer
    %s17 = sadd.s32 1, %s13
  $region7: #{tpu_custom_call.1} parent=0 // loop_footer_branch
    %12 = sbr.rel target = $region3
  $region8: #{tpu_custom_call.1} parent=0 // loop_exit
    _

</llo_original>
